<compile_context>
chip_gen: v5e
topology: v5e:2x2
jax: 0.10.0
libtpu: 0.0.40
codegen_flags: <defaults>
</compile_context>

<pallas_src>
import functools

import jax
import jax.numpy as jnp
from jax.experimental import pallas as pl
from jax.experimental.pallas import tpu as pltpu


def _round_up(x: int, m: int) -> int:
    return ((x + m - 1) // m) * m


def _cdiv(a: int, b: int) -> int:
    return (a + b - 1) // b


def _chip_info():
    """(is_v5, is_v7, vmem_capacity_bytes) with conservative fallbacks."""
    kind = ""
    try:
        kind = jax.devices()[0].device_kind.lower()
    except Exception:
        pass
    is_v5 = "v5" in kind
    is_v7 = "v7" in kind
    vmem_bytes = 0
    try:
        info = pltpu.get_tpu_info()
        vmem_bytes = int(getattr(info, "vmem_capacity_bytes", 0) or 0)
    except Exception:
        vmem_bytes = 0
    if vmem_bytes <= 0:
        vmem_bytes = (64 << 20) if is_v7 else (128 << 20)
    return is_v5, is_v7, vmem_bytes


def _apply_activation(h, activation: str):
    if activation == "relu":
        return jnp.maximum(h, 0.0)
    elif activation == "tanh":
        return jnp.tanh(h)
    elif activation == "sigmoid":
        return jax.nn.sigmoid(h)
    elif activation == "leakyrelu":
        # PyTorch default negative_slope = 0.01
        return jnp.where(h >= 0.0, h, 0.01 * h)
    else:
        raise ValueError(f"bad activation {activation}")


def _make_mlp_kernel(n_hidden: int, activation: str, act_dtype):
    """Whole SequentialNet forward for one batch tile.

    Ref order: x, w_first, b_first, [w_h0, b_h0, ...], w_last, b_last, out.
    Weights are bf16 (MXU inputs), biases f32, MXU accumulation f32.
    Activations run in `act_dtype` (bf16 on v6e/v7x, f32 on v5e).
    """

    def kernel(*refs):
        x_ref = refs[0]
        w_first, b_first = refs[1], refs[2]
        hidden_refs = refs[3 : 3 + 2 * n_hidden]
        w_last, b_last = refs[3 + 2 * n_hidden], refs[4 + 2 * n_hidden]
        o_ref = refs[5 + 2 * n_hidden]

        # first_layer (no activation after it in the reference forward)
        h = (
            jnp.dot(x_ref[...], w_first[...], preferred_element_type=jnp.float32)
            + b_first[...]
        )

        # hidden_layers: Linear -> (dropout, identity for p=0) -> activation
        for i in range(n_hidden):
            w_h = hidden_refs[2 * i]
            b_h = hidden_refs[2 * i + 1]
            h = (
                jnp.dot(
                    h.astype(w_h.dtype), w_h[...],
                    preferred_element_type=jnp.float32,
                )
                + b_h[...]
            )
            h = _apply_activation(h.astype(act_dtype), activation)

        # last_layer (lane-dense padded N)
        o_ref[...] = (
            jnp.dot(
                h.astype(w_last.dtype), w_last[...],
                preferred_element_type=jnp.float32,
            )
            + b_last[...]
        ).astype(o_ref.dtype)

    return kernel


def sequential_net_forward(x, params, *, n_hidden: int, activation: str,
                           batch_tile: int | None = None):
    """params: w_first [in, L], b_first [1, L], w_hidden/b_hidden lists,
    w_last [L, out], b_last [1, out]. All f32; bf16 cast happens here."""
    batch, in_features = x.shape
    L = params["w_first"].shape[1]
    out_features = params["w_last"].shape[1]

    is_v5, is_v7, vmem_capacity = _chip_info()
    compute_dtype = jnp.bfloat16
    # v5e's VPU/EUP have no bf16 -> keep activation math in f32 there.
    act_dtype = jnp.float32 if is_v5 else jnp.bfloat16
    sub = 16  # bf16 packs 16 rows per vreg -> tiles in multiples of 16

    # --- lane-dense output padding (out_features -> multiple of 128) ---------
    out_padded = _round_up(out_features, 128)

    # --- operand prep (pad + bf16 cast for MXU inputs, f32 biases) -----------
    w_first = params["w_first"].astype(compute_dtype)
    b_first = params["b_first"].astype(jnp.float32)

    hidden_ops = []
    for i in range(n_hidden):
        hidden_ops.append(params["w_hidden"][i].astype(compute_dtype))
        hidden_ops.append(params["b_hidden"][i].astype(jnp.float32))

    w_last = params["w_last"]
    b_last = params["b_last"]
    if out_padded != out_features:
        w_last = jnp.pad(w_last, ((0, 0), (0, out_padded - out_features)))
        b_last = jnp.pad(b_last, ((0, 0), (0, out_padded - out_features)))
    w_last = w_last.astype(compute_dtype)
    b_last = b_last.astype(jnp.float32)

    weight_ops = [w_first, b_first] + hidden_ops + [w_last, b_last]
    resident_bytes = sum(int(a.size) * a.dtype.itemsize for a in weight_ops)

    # --- VMEM accounting ------------------------------------------------------
    def stream_bytes(tb):
        # bf16 x tile in, f32 padded output tile out
        return tb * in_features * 2 + tb * out_padded * 4

    def interm_bytes(tb):
        # live f32 accumulator + activation copy + bf16 matmul-input copy of h
        return 3 * tb * max(L, out_padded) * 4

    headroom = 2 << 20
    # ~48 MiB on v7x (64 MiB/TC), ~96 MiB on v5e/v6e (128 MiB)
    vmem_cap = int(vmem_capacity * 3 // 4)

    # --- batch tile selection -------------------------------------------------
    default_tile = 128 if is_v5 else 256  # v5e MXU is 128-wide; v6e/v7x are 256
    tile_cap = batch_tile if batch_tile is not None else default_tile
    tb = _round_up(min(max(tile_cap, sub), _round_up(batch, sub)), sub)

    single_buffer_resident = False
    while True:
        fp_double = (2 * resident_bytes + 2 * stream_bytes(tb)
                     + interm_bytes(tb) + headroom)
        if fp_double <= vmem_cap:
            footprint = fp_double
            break
        fp_single = (resident_bytes + 2 * stream_bytes(tb)
                     + interm_bytes(tb) + headroom)
        if fp_single <= vmem_cap or tb <= sub:
            # v7x guard: single-buffer the resident weights (constant index maps
            # -> Buffered(1) is safe) before shrinking the batch tile further.
            single_buffer_resident = True
            footprint = fp_single
            break
        tb = _round_up(tb // 2, sub)

    num_tiles = _cdiv(batch, tb)
    # v7x: prefer an even tile count so the 'parallel' batch axis splits evenly
    # across both TensorCores (no effect on single-TC v5e/v6e).
    if is_v7 and num_tiles > 1 and num_tiles % 2 == 1:
        tb_even = _round_up(_cdiv(batch, num_tiles + 1), sub)
        if tb_even >= sub and _cdiv(batch, tb_even) % 2 == 0:
            tb = tb_even
            num_tiles = _cdiv(batch, tb)
            base = resident_bytes if single_buffer_resident else 2 * resident_bytes
            footprint = base + 2 * stream_bytes(tb) + interm_bytes(tb) + headroom

    padded_batch = num_tiles * tb

    x_p = x
    if padded_batch != batch:
        x_p = jnp.pad(x_p, ((0, padded_batch - batch), (0, 0)))
    x_p = x_p.astype(compute_dtype)

    operands = [x_p] + weight_ops

    # --- BlockSpecs: stream x/out over the batch grid, weights resident ------
    def resident_spec(arr):
        zeros = (0,) * arr.ndim
        if single_buffer_resident:
            return pl.BlockSpec(arr.shape, lambda i, _z=zeros: _z,
                                pipeline_mode=pl.Buffered(1))
        return pl.BlockSpec(arr.shape, lambda i, _z=zeros: _z)

    in_specs = [pl.BlockSpec((tb, in_features), lambda i: (i, 0))]
    in_specs += [resident_spec(a) for a in weight_ops]
    out_specs = pl.BlockSpec((tb, out_padded), lambda i: (i, 0))

    # --- cost estimate --------------------------------------------------------
    flops = 2 * padded_batch * (
        in_features * L + n_hidden * L * L + L * out_padded
    )
    transcendentals = (
        padded_batch * L * n_hidden if activation in ("tanh", "sigmoid") else 0
    )
    bytes_accessed = (
        sum(int(a.size) * a.dtype.itemsize for a in operands)
        + padded_batch * out_padded * 4
    )
    cost = pl.CostEstimate(
        flops=flops, transcendentals=transcendentals, bytes_accessed=bytes_accessed
    )

    vmem_limit = int(min(vmem_cap, max(footprint, 8 << 20)))

    kernel = _make_mlp_kernel(n_hidden, activation, act_dtype)

    out_full = pl.pallas_call(
        kernel,
        out_shape=jax.ShapeDtypeStruct((padded_batch, out_padded), jnp.float32),
        grid=(num_tiles,),
        in_specs=in_specs,
        out_specs=out_specs,
        compiler_params=pltpu.CompilerParams(
            dimension_semantics=("parallel",),  # batch tiles across v7x's 2 TCs
            vmem_limit_bytes=vmem_limit,
        ),
        cost_estimate=cost,
    )(*operands)

    return out_full[:batch, :out_features]


def init_params(key, in_channels, out_channels, L, n_hidden):
    """PyTorch-style uniform(-1/sqrt(fan_in), 1/sqrt(fan_in)) init, f32.
    Weights stored transposed as [in_features, out_features]."""

    def linear(key, fan_in, fan_out):
        kw, kb = jax.random.split(key)
        bound = 1.0 / jnp.sqrt(fan_in)
        w = jax.random.uniform(kw, (fan_in, fan_out), jnp.float32, -bound, bound)
        b = jax.random.uniform(kb, (1, fan_out), jnp.float32, -bound, bound)
        return w, b

    keys = jax.random.split(key, n_hidden + 2)
    w_first, b_first = linear(keys[0], in_channels, L)
    w_hidden, b_hidden = [], []
    for i in range(n_hidden):
        w_h, b_h = linear(keys[1 + i], L, L)
        w_hidden.append(w_h)
        b_hidden.append(b_h)
    w_last, b_last = linear(keys[n_hidden + 1], L, out_channels)
    return {
        "w_first": w_first,
        "b_first": b_first,
        "w_hidden": w_hidden,
        "b_hidden": b_hidden,
        "w_last": w_last,
        "b_last": b_last,
    }


def reference_forward(x, params, *, n_hidden, activation):
    h = x @ params["w_first"] + params["b_first"]
    for i in range(n_hidden):
        h = h @ params["w_hidden"][i] + params["b_hidden"][i]
        h = _apply_activation(h, activation)
    return h @ params["w_last"] + params["b_last"]


if __name__ == "__main__":
    # SequentialNet(activation='relu', in_channels=32, out_channels=16, L=256,
    #               n_hidden=1, p=0)
    activation = "relu"
    in_channels = 32
    out_channels = 16
    L = 256
    n_hidden = 1

    key = jax.random.PRNGKey(0)
    kx, kp, kx2 = jax.random.split(key, 3)
    params = init_params(kp, in_channels, out_channels, L, n_hidden)

    # Case 1: small batch, default tiling -> single grid step (tb = 32, grid=(1,)).
    batch = 20
    x = jax.random.normal(kx, (batch, in_channels), jnp.float32)
    fwd = jax.jit(
        functools.partial(
            sequential_net_forward, n_hidden=n_hidden, activation=activation
        )
    )
    out = jax.block_until_ready(fwd(x, params))
    ref = reference_forward(x, params, n_hidden=n_hidden, activation=activation)
    assert out.shape == (batch, out_channels)
    assert jnp.allclose(out, ref, atol=5e-2, rtol=5e-2), (
        f"case1 max abs err {jnp.max(jnp.abs(out - ref))}"
    )

    # Case 2: multi-tile batch pipeline (padding + grid > 1) exercised.
    batch2 = 200
    x2 = jax.random.normal(kx2, (batch2, in_channels), jnp.float32)
    fwd2 = jax.jit(
        functools.partial(
            sequential_net_forward, n_hidden=n_hidden, activation=activation,
            batch_tile=64,
        )
    )
    out2 = jax.block_until_ready(fwd2(x2, params))
    ref2 = reference_forward(x2, params, n_hidden=n_hidden, activation=activation)
    assert out2.shape == (batch2, out_channels)
    assert jnp.allclose(out2, ref2, atol=5e-2, rtol=5e-2), (
        f"case2 max abs err {jnp.max(jnp.abs(out2 - ref2))}"
    )

    print("KERNEL_OK")
</pallas_src>

<mosaic_0001>
module attributes {stable_mosaic.version = 11 : i64} {
  func.func @kernel(%arg0: i32, %arg1: memref<32x32xbf16, #tpu.memory_space<vmem>>, %arg2: memref<32x256xbf16, #tpu.memory_space<vmem>>, %arg3: memref<1x256xf32, #tpu.memory_space<vmem>>, %arg4: memref<256x256xbf16, #tpu.memory_space<vmem>>, %arg5: memref<1x256xf32, #tpu.memory_space<vmem>>, %arg6: memref<256x128xbf16, #tpu.memory_space<vmem>>, %arg7: memref<1x128xf32, #tpu.memory_space<vmem>>, %arg8: memref<32x128xf32, #tpu.memory_space<vmem>>) attributes {dimension_semantics = [#tpu.dimension_semantics<parallel>], iteration_bounds = array<i64: 1>, scalar_prefetch = 0 : i64, scratch_operands = 0 : i64, tpu.core_type = #tpu.core_type<tc>, window_params = [{transform_indices = @transform_0, window_bounds = array<i64: 32, 32>}, {pipeline_mode = #tpu.pipeline_mode<synchronous>, transform_indices = @transform_1, window_bounds = array<i64: 32, 256>}, {pipeline_mode = #tpu.pipeline_mode<synchronous>, transform_indices = @transform_2, window_bounds = array<i64: 1, 256>}, {pipeline_mode = #tpu.pipeline_mode<synchronous>, transform_indices = @transform_3, window_bounds = array<i64: 256, 256>}, {pipeline_mode = #tpu.pipeline_mode<synchronous>, transform_indices = @transform_4, window_bounds = array<i64: 1, 256>}, {pipeline_mode = #tpu.pipeline_mode<synchronous>, transform_indices = @transform_5, window_bounds = array<i64: 256, 128>}, {pipeline_mode = #tpu.pipeline_mode<synchronous>, transform_indices = @transform_6, window_bounds = array<i64: 1, 128>}, {transform_indices = @transform_7, window_bounds = array<i64: 32, 128>}]} {
    %c0 = arith.constant 0 : index
    %c0_0 = arith.constant 0 : index
    %0 = vector.load %arg1[%c0, %c0_0] : memref<32x32xbf16, #tpu.memory_space<vmem>>, vector<32x32xbf16>
    %c0_1 = arith.constant 0 : index
    %c0_2 = arith.constant 0 : index
    %1 = vector.load %arg2[%c0_1, %c0_2] : memref<32x256xbf16, #tpu.memory_space<vmem>>, vector<32x256xbf16>
    %cst = arith.constant dense<0.000000e+00> : vector<32x256xf32>
    %2 = tpu.matmul %0, %1, %cst {dimension_numbers = #tpu.dot_dimension_numbers<[1], [0], [0], [1], [0, 0, 1, 1], [], []>} : vector<32x32xbf16>, vector<32x256xbf16>, vector<32x256xf32> -> vector<32x256xf32>
    %c0_3 = arith.constant 0 : index
    %c0_4 = arith.constant 0 : index
    %3 = vector.load %arg3[%c0_3, %c0_4] : memref<1x256xf32, #tpu.memory_space<vmem>>, vector<1x256xf32>
    %4 = vector.broadcast %3 : vector<1x256xf32> to vector<32x256xf32>
    %5 = arith.addf %2, %4 : vector<32x256xf32>
    %6 = arith.truncf %5 : vector<32x256xf32> to vector<32x256xbf16>
    %c0_5 = arith.constant 0 : index
    %c0_6 = arith.constant 0 : index
    %7 = vector.load %arg4[%c0_5, %c0_6] : memref<256x256xbf16, #tpu.memory_space<vmem>>, vector<256x256xbf16>
    %cst_7 = arith.constant dense<0.000000e+00> : vector<32x256xf32>
    %8 = tpu.matmul %6, %7, %cst_7 {dimension_numbers = #tpu.dot_dimension_numbers<[1], [0], [0], [1], [0, 0, 1, 1], [], []>} : vector<32x256xbf16>, vector<256x256xbf16>, vector<32x256xf32> -> vector<32x256xf32>
    %c0_8 = arith.constant 0 : index
    %c0_9 = arith.constant 0 : index
    %9 = vector.load %arg5[%c0_8, %c0_9] : memref<1x256xf32, #tpu.memory_space<vmem>>, vector<1x256xf32>
    %10 = vector.broadcast %9 : vector<1x256xf32> to vector<32x256xf32>
    %11 = arith.addf %8, %10 : vector<32x256xf32>
    %12 = arith.truncf %11 : vector<32x256xf32> to vector<32x256xbf16>
    %cst_10 = arith.constant 0.000000e+00 : bf16
    %13 = vector.broadcast %cst_10 : bf16 to vector<32x256xbf16>
    %14 = arith.maximumf %12, %13 : vector<32x256xbf16>
    %c0_11 = arith.constant 0 : index
    %c0_12 = arith.constant 0 : index
    %15 = vector.load %arg6[%c0_11, %c0_12] : memref<256x128xbf16, #tpu.memory_space<vmem>>, vector<256x128xbf16>
    %cst_13 = arith.constant dense<0.000000e+00> : vector<32x128xf32>
    %16 = tpu.matmul %14, %15, %cst_13 {dimension_numbers = #tpu.dot_dimension_numbers<[1], [0], [0], [1], [0, 0, 1, 1], [], []>} : vector<32x256xbf16>, vector<256x128xbf16>, vector<32x128xf32> -> vector<32x128xf32>
    %c0_14 = arith.constant 0 : index
    %c0_15 = arith.constant 0 : index
    %17 = vector.load %arg7[%c0_14, %c0_15] : memref<1x128xf32, #tpu.memory_space<vmem>>, vector<1x128xf32>
    %18 = vector.broadcast %17 : vector<1x128xf32> to vector<32x128xf32>
    %19 = arith.addf %16, %18 : vector<32x128xf32>
    %c0_16 = arith.constant 0 : index
    %c0_17 = arith.constant 0 : index
    %20 = vector.load %arg8[%c0_16, %c0_17] : memref<32x128xf32, #tpu.memory_space<vmem>>, vector<32x128xf32>
    tpu.vector_store %arg8[%c0_16, %c0_17], %19 {strides = array<i32>} : memref<32x128xf32, #tpu.memory_space<vmem>>, vector<32x128xf32>,
    return
  }
  func.func @transform_0(%arg0: i32) -> (i32, i32) {
    %c0_i32 = arith.constant 0 : i32
    %c0_i32_0 = arith.constant 0 : i32
    return %arg0, %c0_i32 : i32, i32
  }
  func.func @transform_1(%arg0: i32) -> (i32, i32) {
    %c0_i32 = arith.constant 0 : i32
    %c0_i32_0 = arith.constant 0 : i32
    %c0_i32_1 = arith.constant 0 : i32
    return %c0_i32, %c0_i32_0 : i32, i32
  }
  func.func @transform_2(%arg0: i32) -> (i32, i32) {
    %c0_i32 = arith.constant 0 : i32
    %c0_i32_0 = arith.constant 0 : i32
    %c0_i32_1 = arith.constant 0 : i32
    return %c0_i32, %c0_i32_0 : i32, i32
  }
  func.func @transform_3(%arg0: i32) -> (i32, i32) {
    %c0_i32 = arith.constant 0 : i32
    %c0_i32_0 = arith.constant 0 : i32
    %c0_i32_1 = arith.constant 0 : i32
    return %c0_i32, %c0_i32_0 : i32, i32
  }
  func.func @transform_4(%arg0: i32) -> (i32, i32) {
    %c0_i32 = arith.constant 0 : i32
    %c0_i32_0 = arith.constant 0 : i32
    %c0_i32_1 = arith.constant 0 : i32
    return %c0_i32, %c0_i32_0 : i32, i32
  }
  func.func @transform_5(%arg0: i32) -> (i32, i32) {
    %c0_i32 = arith.constant 0 : i32
    %c0_i32_0 = arith.constant 0 : i32
    %c0_i32_1 = arith.constant 0 : i32
    return %c0_i32, %c0_i32_0 : i32, i32
  }
  func.func @transform_6(%arg0: i32) -> (i32, i32) {
    %c0_i32 = arith.constant 0 : i32
    %c0_i32_0 = arith.constant 0 : i32
    %c0_i32_1 = arith.constant 0 : i32
    return %c0_i32, %c0_i32_0 : i32, i32
  }
  func.func @transform_7(%arg0: i32) -> (i32, i32) {
    %c0_i32 = arith.constant 0 : i32
    %c0_i32_0 = arith.constant 0 : i32
    return %arg0, %c0_i32 : i32, i32
  }
}

</mosaic_0001>

<llo_original>
// kernel: sequential_net_forward.1
$region0: #{sequential_net_forward.1}
  #allocation0 [shape = 'u32[]', space=smem, size = 0x4, offset = 0x4, fixed_abs, tag = 'smem constant byte address 0x4 - core index']
  #allocation1 [shape = 'u32[72,128]{1,0:T(1,128)}', space=vmem, size = 0x9000, scoped, tag = 'internal scratch']
  %s0 = inlined_call_operand.vmem [shape: bf16[32,32], index: 0, kind: input, shape index: {}]
  %s1 = inlined_call_operand.vmem [shape: bf16[32,256], index: 1, kind: input, shape index: {}]
  %s2 = inlined_call_operand.vmem [shape: f32[1,256], index: 2, kind: input, shape index: {}]
  %s3 = inlined_call_operand.vmem [shape: bf16[256,256], index: 3, kind: input, shape index: {}]
  %s4 = inlined_call_operand.vmem [shape: f32[1,256], index: 4, kind: input, shape index: {}]
  %s5 = inlined_call_operand.vmem [shape: bf16[256,128], index: 5, kind: input, shape index: {}]
  %s6 = inlined_call_operand.vmem [shape: f32[1,128], index: 6, kind: input, shape index: {}]
  %s7 = inlined_call_operand.vmem [shape: f32[32,128], index: 7, kind: output, shape index: {}]
  %s8 = sld [smem:[#allocation0]]
  $region38: #{sequential_net_forward.1} parent=0
    _
  %s10 = ssub.s32 1, %s8
  %s11 = scalar_select 0, %s10, %s8
  // Predicated region
  $region2: #{sequential_net_forward.1} parent=0 // pred_check
    _
  $region3: #{sequential_net_forward.1} parent=0 // pred_check_branch
    %13 = sbr.rel (0) target = $region5
  $region4: #{sequential_net_forward.1} parent=0 // pred_region
    _
  $region5: #{sequential_net_forward.1} parent=0 // pred_fallthru
    _
  // Predicated region
  $region6: #{sequential_net_forward.1} parent=0 // pred_check
    _
  $region7: #{sequential_net_forward.1} parent=0 // pred_check_branch
    %15 = sbr.rel (0) target = $region9
  $region8: #{sequential_net_forward.1} parent=0 // pred_region
    _
  $region9: #{sequential_net_forward.1} parent=0 // pred_fallthru
    _
  // Predicated region
  $region10: #{sequential_net_forward.1} parent=0 // pred_check
    _
  $region11: #{sequential_net_forward.1} parent=0 // pred_check_branch
    %17 = sbr.rel (0) target = $region13
  $region12: #{sequential_net_forward.1} parent=0 // pred_region
    _
  $region13: #{sequential_net_forward.1} parent=0 // pred_fallthru
    _
  // Predicated region
  $region14: #{sequential_net_forward.1} parent=0 // pred_check
    _
  $region15: #{sequential_net_forward.1} parent=0 // pred_check_branch
    %19 = sbr.rel (0) target = $region17
  $region16: #{sequential_net_forward.1} parent=0 // pred_region
    _
  $region17: #{sequential_net_forward.1} parent=0 // pred_fallthru
    _
  // Predicated region
  $region18: #{sequential_net_forward.1} parent=0 // pred_check
    _
  $region19: #{sequential_net_forward.1} parent=0 // pred_check_branch
    %21 = sbr.rel (0) target = $region21
  $region20: #{sequential_net_forward.1} parent=0 // pred_region
    _
  $region21: #{sequential_net_forward.1} parent=0 // pred_fallthru
    _
  // Predicated region
  $region22: #{sequential_net_forward.1} parent=0 // pred_check
    _
  $region23: #{sequential_net_forward.1} parent=0 // pred_check_branch
    %23 = sbr.rel (0) target = $region25
  $region24: #{sequential_net_forward.1} parent=0 // pred_region
    _
  $region25: #{sequential_net_forward.1} parent=0 // pred_fallthru
    _
  // Predicated region
  $region26: #{sequential_net_forward.1} parent=0 // pred_check
    _
  $region27: #{sequential_net_forward.1} parent=0 // pred_check_branch
    %25 = sbr.rel (0) target = $region29
  $region28: #{sequential_net_forward.1} parent=0 // pred_region
    _
  $region29: #{sequential_net_forward.1} parent=0 // pred_fallthru
    _
  %v27 = vld [vmem:[%s0] sm:$0xf]
  %v28 = vld [vmem:[%s0 + $0x4] sm:$0xf]
  %v29 = vld [vmem:[%s0 + $0x8] sm:$0xf]
  %v30 = vld [vmem:[%s0 + $0xc] sm:$0xf]
  %v31 = vld [vmem:[%s1] sm:$0xff]
  %v32 = vld [vmem:[%s1 + $0x8] sm:$0xff]
  %v33 = vld [vmem:[%s1 + $0x10] sm:$0xff]
  %v34 = vld [vmem:[%s1 + $0x18] sm:$0xff]
  %v35 = vld [vmem:[%s2] sm:$0x3]
  %v37 = vperm.slane %v35, 0
  %v38 = vperm.slane %v35, 1
  %v45 = vunpack.c.l.b16 %v27
  %v46 = vunpack.c.l.b16 %v28
  %v47 = vunpack.c.l.b16 %v29
  %v48 = vunpack.c.l.b16 %v30
  %v49 = vpack.c.b16 %v46, %v45
  %v50 = vpack.c.b16 %v48, %v47
  %v55 = vunpack.c.l.b16 %v31
  %v56 = vunpack.c.h.b16 %v31
  %v57 = vunpack.c.l.b16 %v32
  %v58 = vunpack.c.h.b16 %v32
  %v59 = vunpack.c.l.b16 %v33
  %v60 = vunpack.c.h.b16 %v33
  %v61 = vunpack.c.l.b16 %v34
  %v62 = vunpack.c.h.b16 %v34
  %v63 = vpack.c.b16 %v57, %v55
  %v64 = vpack.c.b16 %v58, %v56
  %v65 = vpack.c.b16 %v61, %v59
  %v66 = vpack.c.b16 %v62, %v60
  %vm71 = vcmask 261120
  %v73 = vsel %vm71, %v49, 0
  %v76 = vsel %vm71, %v50, 0
  %78 = vmatpush.bf16.msra.mxu0 0
  %79 = vmatpush.bf16.msra.mxu0 0
  %80 = vmatpush.bf16.msra.mxu0 0
  %81 = vmatpush.bf16.msra.mxu0 0
  %82 = vmatpush.bf16.msra.mxu0 0
  %83 = vmatpush.bf16.msra.mxu0 0
  %84 = vmatpush.bf16.msra.mxu0 %v65
  %85 = vmatpush.bf16.msra.mxu0 %v63
  %86 = vmatmul.bf16.gmra.mxu0 %v73
  %v87 = vpop.f32.mrf.mxu0
  %v88 = vadd.f32 %v37, %v87
  %v89 = vpop.f32.mrf.mxu0
  %v90 = vadd.f32 %v37, %v89
  %91 = vmatmul.bf16.gmra.mxu0 %v76
  %v92 = vpop.f32.mrf.mxu0
  %v93 = vadd.f32 %v37, %v92
  %v94 = vpop.f32.mrf.mxu0
  %v95 = vadd.f32 %v37, %v94
  %96 = vdwg.mxu0
  %97 = vmatpush.bf16.msra.mxu0 0
  %98 = vmatpush.bf16.msra.mxu0 0
  %99 = vmatpush.bf16.msra.mxu0 0
  %100 = vmatpush.bf16.msra.mxu0 0
  %101 = vmatpush.bf16.msra.mxu0 0
  %102 = vmatpush.bf16.msra.mxu0 0
  %103 = vmatpush.bf16.msra.mxu0 %v66
  %104 = vmatpush.bf16.msra.mxu0 %v64
  %105 = vmatmul.bf16.gmra.mxu0 %v73
  %v106 = vpop.f32.mrf.mxu0
  %v107 = vadd.f32 %v38, %v106
  %v108 = vpop.f32.mrf.mxu0
  %v109 = vadd.f32 %v38, %v108
  %110 = vmatmul.bf16.gmra.mxu0 %v76
  %v111 = vpop.f32.mrf.mxu0
  %v112 = vadd.f32 %v38, %v111
  %v113 = vpop.f32.mrf.mxu0
  %v114 = vadd.f32 %v38, %v113
  %115 = vdwg.mxu0
  %v116 = vpack.c.bf16 %v90, %v88
  %v117 = vpack.c.bf16 %v109, %v107
  %v118 = vpack.c.bf16 %v95, %v93
  %v119 = vpack.c.bf16 %v114, %v112
  %v120 = vld [vmem:[%s3] sm:$0xff]
  %v121 = vld [vmem:[%s3 + $0x8] sm:$0xff]
  %v122 = vld [vmem:[%s3 + $0x10] sm:$0xff]
  %v123 = vld [vmem:[%s3 + $0x18] sm:$0xff]
  %v124 = vld [vmem:[%s3 + $0x20] sm:$0xff]
  %v125 = vld [vmem:[%s3 + $0x28] sm:$0xff]
  %v126 = vld [vmem:[%s3 + $0x30] sm:$0xff]
  %v127 = vld [vmem:[%s3 + $0x38] sm:$0xff]
  %v128 = vld [vmem:[%s3 + $0x40] sm:$0xff]
  %v129 = vld [vmem:[%s3 + $0x48] sm:$0xff]
  %v130 = vld [vmem:[%s3 + $0x50] sm:$0xff]
  %v131 = vld [vmem:[%s3 + $0x58] sm:$0xff]
  %v132 = vld [vmem:[%s3 + $0x60] sm:$0xff]
  %v133 = vld [vmem:[%s3 + $0x68] sm:$0xff]
  %v134 = vld [vmem:[%s3 + $0x70] sm:$0xff]
  %v135 = vld [vmem:[%s3 + $0x78] sm:$0xff]
  %v136 = vld [vmem:[%s3 + $0x80] sm:$0xff]
  %v137 = vld [vmem:[%s3 + $0x88] sm:$0xff]
  %v138 = vld [vmem:[%s3 + $0x90] sm:$0xff]
  %v139 = vld [vmem:[%s3 + $0x98] sm:$0xff]
  %v140 = vld [vmem:[%s3 + $0xa0] sm:$0xff]
  %v141 = vld [vmem:[%s3 + $0xa8] sm:$0xff]
  %v142 = vld [vmem:[%s3 + $0xb0] sm:$0xff]
  %v143 = vld [vmem:[%s3 + $0xb8] sm:$0xff]
  %v144 = vld [vmem:[%s3 + $0xc0] sm:$0xff]
  %v145 = vld [vmem:[%s3 + $0xc8] sm:$0xff]
  %v146 = vld [vmem:[%s3 + $0xd0] sm:$0xff]
  %v147 = vld [vmem:[%s3 + $0xd8] sm:$0xff]
  %v148 = vld [vmem:[%s3 + $0xe0] sm:$0xff]
  %v149 = vld [vmem:[%s3 + $0xe8] sm:$0xff]
  %v150 = vld [vmem:[%s3 + $0xf0] sm:$0xff]
  %v151 = vld [vmem:[%s3 + $0xf8] sm:$0xff]
  %v152 = vld [vmem:[%s4] sm:$0x3]
  %v154 = vperm.slane %v152, 0
  %v155 = vperm.slane %v152, 1
  %v190 = vunpack.c.l.b16 %v120
  %v191 = vunpack.c.h.b16 %v120
  %v192 = vunpack.c.l.b16 %v121
  %v193 = vunpack.c.h.b16 %v121
  %v194 = vunpack.c.l.b16 %v122
  %v195 = vunpack.c.h.b16 %v122
  %v196 = vunpack.c.l.b16 %v123
  %v197 = vunpack.c.h.b16 %v123
  %v198 = vunpack.c.l.b16 %v124
  %v199 = vunpack.c.h.b16 %v124
  %v200 = vunpack.c.l.b16 %v125
  %v201 = vunpack.c.h.b16 %v125
  %v202 = vunpack.c.l.b16 %v126
  %v203 = vunpack.c.h.b16 %v126
  %v204 = vunpack.c.l.b16 %v127
  %v205 = vunpack.c.h.b16 %v127
  %v206 = vunpack.c.l.b16 %v128
  %v207 = vunpack.c.h.b16 %v128
  %v208 = vunpack.c.l.b16 %v129
  %v209 = vunpack.c.h.b16 %v129
  %v210 = vunpack.c.l.b16 %v130
  %v211 = vunpack.c.h.b16 %v130
  %v212 = vunpack.c.l.b16 %v131
  %v213 = vunpack.c.h.b16 %v131
  %v214 = vunpack.c.l.b16 %v132
  %v215 = vunpack.c.h.b16 %v132
  %v216 = vunpack.c.l.b16 %v133
  %v217 = vunpack.c.h.b16 %v133
  %v218 = vunpack.c.l.b16 %v134
  %v219 = vunpack.c.h.b16 %v134
  %v220 = vunpack.c.l.b16 %v135
  %v221 = vunpack.c.h.b16 %v135
  %v222 = vunpack.c.l.b16 %v136
  %v223 = vunpack.c.h.b16 %v136
  %v224 = vunpack.c.l.b16 %v137
  %v225 = vunpack.c.h.b16 %v137
  %v226 = vunpack.c.l.b16 %v138
  %v227 = vunpack.c.h.b16 %v138
  %v228 = vunpack.c.l.b16 %v139
  %v229 = vunpack.c.h.b16 %v139
  %v230 = vunpack.c.l.b16 %v140
  %v231 = vunpack.c.h.b16 %v140
  %v232 = vunpack.c.l.b16 %v141
  %v233 = vunpack.c.h.b16 %v141
  %v234 = vunpack.c.l.b16 %v142
  %v235 = vunpack.c.h.b16 %v142
  %v236 = vunpack.c.l.b16 %v143
  %v237 = vunpack.c.h.b16 %v143
  %v238 = vunpack.c.l.b16 %v144
  %v239 = vunpack.c.h.b16 %v144
  %v240 = vunpack.c.l.b16 %v145
  %v241 = vunpack.c.h.b16 %v145
  %v242 = vunpack.c.l.b16 %v146
  %v243 = vunpack.c.h.b16 %v146
  %v244 = vunpack.c.l.b16 %v147
  %v245 = vunpack.c.h.b16 %v147
  %v246 = vunpack.c.l.b16 %v148
  %v247 = vunpack.c.h.b16 %v148
  %v248 = vunpack.c.l.b16 %v149
  %v249 = vunpack.c.h.b16 %v149
  %v250 = vunpack.c.l.b16 %v150
  %v251 = vunpack.c.h.b16 %v150
  %v252 = vunpack.c.l.b16 %v151
  %v253 = vunpack.c.h.b16 %v151
  %v254 = vpack.c.b16 %v192, %v190
  %v255 = vpack.c.b16 %v193, %v191
  %v256 = vpack.c.b16 %v196, %v194
  %v257 = vpack.c.b16 %v197, %v195
  %v258 = vpack.c.b16 %v200, %v198
  %v259 = vpack.c.b16 %v201, %v199
  %v260 = vpack.c.b16 %v204, %v202
  %v261 = vpack.c.b16 %v205, %v203
  %v262 = vpack.c.b16 %v208, %v206
  %v263 = vpack.c.b16 %v209, %v207
  %v264 = vpack.c.b16 %v212, %v210
  %v265 = vpack.c.b16 %v213, %v211
  %v266 = vpack.c.b16 %v216, %v214
  %v267 = vpack.c.b16 %v217, %v215
  %v268 = vpack.c.b16 %v220, %v218
  %v269 = vpack.c.b16 %v221, %v219
  %v270 = vpack.c.b16 %v224, %v222
  %v271 = vpack.c.b16 %v225, %v223
  %v272 = vpack.c.b16 %v228, %v226
  %v273 = vpack.c.b16 %v229, %v227
  %v274 = vpack.c.b16 %v232, %v230
  %v275 = vpack.c.b16 %v233, %v231
  %v276 = vpack.c.b16 %v236, %v234
  %v277 = vpack.c.b16 %v237, %v235
  %v278 = vpack.c.b16 %v240, %v238
  %v279 = vpack.c.b16 %v241, %v239
  %v280 = vpack.c.b16 %v244, %v242
  %v281 = vpack.c.b16 %v245, %v243
  %v282 = vpack.c.b16 %v248, %v246
  %v283 = vpack.c.b16 %v249, %v247
  %v284 = vpack.c.b16 %v252, %v250
  %v285 = vpack.c.b16 %v253, %v251
  %318 = vmatpush.bf16.msra.mxu0 %v268
  %319 = vmatpush.bf16.msra.mxu0 %v266
  %320 = vmatpush.bf16.msra.mxu0 %v264
  %321 = vmatpush.bf16.msra.mxu0 %v262
  %322 = vmatpush.bf16.msra.mxu0 %v260
  %323 = vmatpush.bf16.msra.mxu0 %v258
  %324 = vmatpush.bf16.msra.mxu0 %v256
  %325 = vmatpush.bf16.msra.mxu0 %v254
  %326 = vmatmul.bf16.gmra.mxu0 %v116
  %v327 = vpop.f32.mrf.mxu0
  %v328 = vadd.f32 %v154, %v327
  %v329 = vpop.f32.mrf.mxu0
  %v330 = vadd.f32 %v154, %v329
  %331 = vmatmul.bf16.gmra.mxu0 %v118
  %v332 = vpop.f32.mrf.mxu0
  %v333 = vadd.f32 %v154, %v332
  %v334 = vpop.f32.mrf.mxu0
  %v335 = vadd.f32 %v154, %v334
  %336 = vdwg.mxu0
  %337 = vmatpush.bf16.msra.mxu0 %v284
  %338 = vmatpush.bf16.msra.mxu0 %v282
  %339 = vmatpush.bf16.msra.mxu0 %v280
  %340 = vmatpush.bf16.msra.mxu0 %v278
  %341 = vmatpush.bf16.msra.mxu0 %v276
  %342 = vmatpush.bf16.msra.mxu0 %v274
  %343 = vmatpush.bf16.msra.mxu0 %v272
  %344 = vmatpush.bf16.msra.mxu0 %v270
  %345 = vmatmul.bf16.gmra.mxu0 %v117
  %v346 = vpop.f32.mrf.mxu0
  %v347 = vadd.f32 %v328, %v346
  %v348 = vpop.f32.mrf.mxu0
  %v349 = vadd.f32 %v330, %v348
  %350 = vmatmul.bf16.gmra.mxu0 %v119
  %v351 = vpop.f32.mrf.mxu0
  %v352 = vadd.f32 %v333, %v351
  %v353 = vpop.f32.mrf.mxu0
  %v354 = vadd.f32 %v335, %v353
  %355 = vdwg.mxu0
  %356 = vmatpush.bf16.msra.mxu0 %v269
  %357 = vmatpush.bf16.msra.mxu0 %v267
  %358 = vmatpush.bf16.msra.mxu0 %v265
  %359 = vmatpush.bf16.msra.mxu0 %v263
  %360 = vmatpush.bf16.msra.mxu0 %v261
  %361 = vmatpush.bf16.msra.mxu0 %v259
  %362 = vmatpush.bf16.msra.mxu0 %v257
  %363 = vmatpush.bf16.msra.mxu0 %v255
  %364 = vmatmul.bf16.gmra.mxu0 %v116
  %v365 = vpop.f32.mrf.mxu0
  %v366 = vadd.f32 %v155, %v365
  %v367 = vpop.f32.mrf.mxu0
  %v368 = vadd.f32 %v155, %v367
  %369 = vmatmul.bf16.gmra.mxu0 %v118
  %v370 = vpop.f32.mrf.mxu0
  %v371 = vadd.f32 %v155, %v370
  %v372 = vpop.f32.mrf.mxu0
  %v373 = vadd.f32 %v155, %v372
  %374 = vdwg.mxu0
  %375 = vmatpush.bf16.msra.mxu0 %v285
  %376 = vmatpush.bf16.msra.mxu0 %v283
  %377 = vmatpush.bf16.msra.mxu0 %v281
  %378 = vmatpush.bf16.msra.mxu0 %v279
  %379 = vmatpush.bf16.msra.mxu0 %v277
  %380 = vmatpush.bf16.msra.mxu0 %v275
  %381 = vmatpush.bf16.msra.mxu0 %v273
  %382 = vmatpush.bf16.msra.mxu0 %v271
  %383 = vmatmul.bf16.gmra.mxu0 %v117
  %v384 = vpop.f32.mrf.mxu0
  %v385 = vadd.f32 %v366, %v384
  %v386 = vpop.f32.mrf.mxu0
  %v387 = vadd.f32 %v368, %v386
  %388 = vmatmul.bf16.gmra.mxu0 %v119
  %v389 = vpop.f32.mrf.mxu0
  %v390 = vadd.f32 %v371, %v389
  %v391 = vpop.f32.mrf.mxu0
  %v392 = vadd.f32 %v373, %v391
  %393 = vdwg.mxu0
  %v394 = vpack.c.bf16 %v385, %v347
  %v395 = vpack.c.bf16 %v387, %v349
  %v396 = vpack.c.bf16 %v390, %v352
  %v397 = vpack.c.bf16 %v392, %v354
  %v398 = vunpack.c.l.bf16 %v394
  %v399 = vunpack.c.h.bf16 %v394
  %v400 = vunpack.c.l.bf16 %v395
  %v401 = vunpack.c.h.bf16 %v395
  %v402 = vunpack.c.l.bf16 %v396
  %v403 = vunpack.c.h.bf16 %v396
  %v404 = vunpack.c.l.bf16 %v397
  %v405 = vunpack.c.h.bf16 %v397
  %v406 = vmax.f32 %v398, 0.0
  %v407 = vmax.f32 %v399, 0.0
  %v408 = vmax.f32 %v400, 0.0
  %v409 = vmax.f32 %v401, 0.0
  %v410 = vmax.f32 %v402, 0.0
  %v411 = vmax.f32 %v403, 0.0
  %v412 = vmax.f32 %v404, 0.0
  %v413 = vmax.f32 %v405, 0.0
  %v414 = vpack.c.bf16 %v408, %v406
  %v415 = vpack.c.bf16 %v409, %v407
  %v416 = vpack.c.bf16 %v412, %v410
  %v417 = vpack.c.bf16 %v413, %v411
  %v418 = vld [vmem:[%s5] sm:$0xf]
  %v419 = vld [vmem:[%s5 + $0x4] sm:$0xf]
  %v420 = vld [vmem:[%s5 + $0x8] sm:$0xf]
  %v421 = vld [vmem:[%s5 + $0xc] sm:$0xf]
  %v422 = vld [vmem:[%s5 + $0x10] sm:$0xf]
  %v423 = vld [vmem:[%s5 + $0x14] sm:$0xf]
  %v424 = vld [vmem:[%s5 + $0x18] sm:$0xf]
  %v425 = vld [vmem:[%s5 + $0x1c] sm:$0xf]
  %v426 = vld [vmem:[%s5 + $0x20] sm:$0xf]
  %v427 = vld [vmem:[%s5 + $0x24] sm:$0xf]
  %v428 = vld [vmem:[%s5 + $0x28] sm:$0xf]
  %v429 = vld [vmem:[%s5 + $0x2c] sm:$0xf]
  %v430 = vld [vmem:[%s5 + $0x30] sm:$0xf]
  %v431 = vld [vmem:[%s5 + $0x34] sm:$0xf]
  %v432 = vld [vmem:[%s5 + $0x38] sm:$0xf]
  %v433 = vld [vmem:[%s5 + $0x3c] sm:$0xf]
  %v434 = vld [vmem:[%s5 + $0x40] sm:$0xf]
  %v435 = vld [vmem:[%s5 + $0x44] sm:$0xf]
  %v436 = vld [vmem:[%s5 + $0x48] sm:$0xf]
  %v437 = vld [vmem:[%s5 + $0x4c] sm:$0xf]
  %v438 = vld [vmem:[%s5 + $0x50] sm:$0xf]
  %v439 = vld [vmem:[%s5 + $0x54] sm:$0xf]
  %v440 = vld [vmem:[%s5 + $0x58] sm:$0xf]
  %v441 = vld [vmem:[%s5 + $0x5c] sm:$0xf]
  %v442 = vld [vmem:[%s5 + $0x60] sm:$0xf]
  %v443 = vld [vmem:[%s5 + $0x64] sm:$0xf]
  %v444 = vld [vmem:[%s5 + $0x68] sm:$0xf]
  %v445 = vld [vmem:[%s5 + $0x6c] sm:$0xf]
  %v446 = vld [vmem:[%s5 + $0x70] sm:$0xf]
  %v447 = vld [vmem:[%s5 + $0x74] sm:$0xf]
  %v448 = vld [vmem:[%s5 + $0x78] sm:$0xf]
  %v449 = vld [vmem:[%s5 + $0x7c] sm:$0xf]
  %v450 = vld [vmem:[%s6] sm:$0x1]
  %v452 = vperm.slane %v450, 0
  %v486 = vunpack.c.l.b16 %v418
  %v487 = vunpack.c.l.b16 %v419
  %v488 = vunpack.c.l.b16 %v420
  %v489 = vunpack.c.l.b16 %v421
  %v490 = vunpack.c.l.b16 %v422
  %v491 = vunpack.c.l.b16 %v423
  %v492 = vunpack.c.l.b16 %v424
  %v493 = vunpack.c.l.b16 %v425
  %v494 = vunpack.c.l.b16 %v426
  %v495 = vunpack.c.l.b16 %v427
  %v496 = vunpack.c.l.b16 %v428
  %v497 = vunpack.c.l.b16 %v429
  %v498 = vunpack.c.l.b16 %v430
  %v499 = vunpack.c.l.b16 %v431
  %v500 = vunpack.c.l.b16 %v432
  %v501 = vunpack.c.l.b16 %v433
  %v502 = vunpack.c.l.b16 %v434
  %v503 = vunpack.c.l.b16 %v435
  %v504 = vunpack.c.l.b16 %v436
  %v505 = vunpack.c.l.b16 %v437
  %v506 = vunpack.c.l.b16 %v438
  %v507 = vunpack.c.l.b16 %v439
  %v508 = vunpack.c.l.b16 %v440
  %v509 = vunpack.c.l.b16 %v441
  %v510 = vunpack.c.l.b16 %v442
  %v511 = vunpack.c.l.b16 %v443
  %v512 = vunpack.c.l.b16 %v444
  %v513 = vunpack.c.l.b16 %v445
  %v514 = vunpack.c.l.b16 %v446
  %v515 = vunpack.c.l.b16 %v447
  %v516 = vunpack.c.l.b16 %v448
  %v517 = vunpack.c.l.b16 %v449
  %v518 = vpack.c.b16 %v487, %v486
  %v519 = vpack.c.b16 %v489, %v488
  %v520 = vpack.c.b16 %v491, %v490
  %v521 = vpack.c.b16 %v493, %v492
  %v522 = vpack.c.b16 %v495, %v494
  %v523 = vpack.c.b16 %v497, %v496
  %v524 = vpack.c.b16 %v499, %v498
  %v525 = vpack.c.b16 %v501, %v500
  %v526 = vpack.c.b16 %v503, %v502
  %v527 = vpack.c.b16 %v505, %v504
  %v528 = vpack.c.b16 %v507, %v506
  %v529 = vpack.c.b16 %v509, %v508
  %v530 = vpack.c.b16 %v511, %v510
  %v531 = vpack.c.b16 %v513, %v512
  %v532 = vpack.c.b16 %v515, %v514
  %v533 = vpack.c.b16 %v517, %v516
  %550 = vmatpush.bf16.msra.mxu0 %v525
  %551 = vmatpush.bf16.msra.mxu0 %v524
  %552 = vmatpush.bf16.msra.mxu0 %v523
  %553 = vmatpush.bf16.msra.mxu0 %v522
  %554 = vmatpush.bf16.msra.mxu0 %v521
  %555 = vmatpush.bf16.msra.mxu0 %v520
  %556 = vmatpush.bf16.msra.mxu0 %v519
  %557 = vmatpush.bf16.msra.mxu0 %v518
  %558 = vmatmul.bf16.gmra.mxu0 %v414
  %v559 = vpop.f32.mrf.mxu0
  %v560 = vadd.f32 %v452, %v559
  %v561 = vpop.f32.mrf.mxu0
  %v562 = vadd.f32 %v452, %v561
  %563 = vmatmul.bf16.gmra.mxu0 %v416
  %v564 = vpop.f32.mrf.mxu0
  %v565 = vadd.f32 %v452, %v564
  %v566 = vpop.f32.mrf.mxu0
  %v567 = vadd.f32 %v452, %v566
  %568 = vdwg.mxu0
  %569 = vmatpush.bf16.msra.mxu0 %v533
  %570 = vmatpush.bf16.msra.mxu0 %v532
  %571 = vmatpush.bf16.msra.mxu0 %v531
  %572 = vmatpush.bf16.msra.mxu0 %v530
  %573 = vmatpush.bf16.msra.mxu0 %v529
  %574 = vmatpush.bf16.msra.mxu0 %v528
  %575 = vmatpush.bf16.msra.mxu0 %v527
  %576 = vmatpush.bf16.msra.mxu0 %v526
  %577 = vmatmul.bf16.gmra.mxu0 %v415
  %v578 = vpop.f32.mrf.mxu0
  %v579 = vadd.f32 %v560, %v578
  %v580 = vpop.f32.mrf.mxu0
  %v581 = vadd.f32 %v562, %v580
  %582 = vmatmul.bf16.gmra.mxu0 %v417
  %v583 = vpop.f32.mrf.mxu0
  %v584 = vadd.f32 %v565, %v583
  %v585 = vpop.f32.mrf.mxu0
  %v586 = vadd.f32 %v567, %v585
  %587 = vdwg.mxu0
  %588 = vst [vmem:[%s7] sm:$0xff] %v579
  %589 = vst [vmem:[%s7 + $0x8] sm:$0xff] %v581
  %590 = vst [vmem:[%s7 + $0x10] sm:$0xff] %v584
  %591 = vst [vmem:[%s7 + $0x18] sm:$0xff] %v586
  // Predicated region
  $region30: #{sequential_net_forward.1} parent=0 // pred_check
    _
  $region31: #{sequential_net_forward.1} parent=0 // pred_check_branch
    %593 = sbr.rel (0) target = $region33
  $region32: #{sequential_net_forward.1} parent=0 // pred_region
    _
  $region33: #{sequential_net_forward.1} parent=0 // pred_fallthru
    _
  // Predicated region
  $region34: #{sequential_net_forward.1} parent=0 // pred_check
    _
  $region35: #{sequential_net_forward.1} parent=0 // pred_check_branch
    %595 = sbr.rel (0) target = $region37
  $region36: #{sequential_net_forward.1} parent=0 // pred_region
    _
  $region37: #{sequential_net_forward.1} parent=0 // pred_fallthru
    _

</llo_original>
